<compile_context>
chip_gen: v6e
topology: v6e:2x2x1
jax: 0.10.0
libtpu: 0.0.40
codegen_flags: <defaults>
</compile_context>

<pallas_src>
import functools
import math

import jax
import jax.numpy as jnp
from jax.experimental import pallas as pl
from jax.experimental.pallas import tpu as pltpu

LANE = 128


def _round_up(x, m):
    return ((x + m - 1) // m) * m


def _vmem_limit_bytes():
    """Per-generation scoped-VMEM budget: ~3/4 of physical, capped at 96 MiB.

    v5e/v6e (128 MiB physical) -> 96 MiB; v7x (64 MiB) -> 48 MiB;
    48 MiB conservative fallback if the query is unavailable.
    """
    cap = 64 * 1024 * 1024
    try:
        info = pltpu.get_tpu_info()
        cap = int(getattr(info, "vmem_capacity_bytes", cap))
    except Exception:
        pass
    return max(32 * 1024 * 1024, min((cap * 3) // 4, 96 * 1024 * 1024))


def _choose_tiles(n_nodes):
    """(TM, TK, Np): row tile, A-column (reduction) tile, padded node count.

    Padding granularity is adaptive (A cost scales with Np^2): mid-size graphs
    pad to 256, large graphs to 512; row tiles grow to 512 when divisible.
    """
    n8 = _round_up(max(n_nodes, 8), 8)
    if n8 <= 512:
        return n8, n8, n8                      # small N: single tile both ways
    if n8 <= 2048:
        np_pad = _round_up(n8, 256)
        tm = 512 if np_pad % 512 == 0 else 256
        tk = 256
        return tm, tk, np_pad
    np_pad = _round_up(n8, 512)
    tm = 512
    tk = 1024 if np_pad % 1024 == 0 else 512
    return tm, tk, np_pad


def _agg_vmem_estimate(tm, tk, np_pad, hpad, mm_bytes, resident_p):
    """Rough kernel-2 VMEM footprint (double-buffered inputs + scratch)."""
    a_bufs = 2 * tm * tk * mm_bytes
    if resident_p:
        p_bufs = 2 * np_pad * 3 * hpad * mm_bytes   # conservative: 2 buffers
    else:
        p_bufs = 2 * tk * 3 * hpad * mm_bytes
    h_bufs = 2 * tm * hpad * 4
    w_bufs = 2 * hpad * hpad * mm_bytes + 4 * hpad * 4
    outs = 3 * 2 * tm * hpad * 4
    acc = tm * 3 * hpad * 4
    return a_bufs + p_bufs + h_bufs + w_bufs + outs + acc


# -----------------------------------------------------------------------------
# Kernel 1: fused gate projection — a single MXU matmul
#   P = [X | H] @ [[Wxz|Wxr|Wxh] ; [Whz|Whr|0]]      -> [TM, 3*Hp] (mm_dtype)
# -----------------------------------------------------------------------------
def proj_kernel(xh_ref, w_ref, p_ref):
    p_ref[...] = jnp.dot(
        xh_ref[...], w_ref[...],
        preferred_element_type=jnp.float32).astype(p_ref.dtype)


def _proj_call(xh, w, tm, np_pad, hpad, out_dtype, vmem_limit):
    kdim = xh.shape[1]
    return pl.pallas_call(
        proj_kernel,
        out_shape=jax.ShapeDtypeStruct((np_pad, 3 * hpad), out_dtype),
        grid=(np_pad // tm,),
        in_specs=[
            pl.BlockSpec((tm, kdim), lambda i: (i, 0)),
            pl.BlockSpec((kdim, 3 * hpad), lambda i: (0, 0)),
        ],
        out_specs=pl.BlockSpec((tm, 3 * hpad), lambda i: (i, 0)),
        compiler_params=pltpu.CompilerParams(
            dimension_semantics=("parallel",),
            vmem_limit_bytes=vmem_limit),
    )(xh, w)


# -----------------------------------------------------------------------------
# Kernel 2: tiled A @ P (k-reduction) + gates + (r*h) @ Whh projection
#   P is VMEM-resident (full-array BlockSpec, sliced per k) when it fits.
# -----------------------------------------------------------------------------
def agg_gates_kernel(a_ref, p_ref, h_ref, whh_ref, bz_ref, br_ref,
                     z_ref, u_ref, q_ref, acc_ref, *, hpad, tk, resident_p):
    k = pl.program_id(1)

    @pl.when(k == 0)
    def _():
        acc_ref[...] = jnp.zeros_like(acc_ref)

    if resident_p:
        start = pl.multiple_of(k * tk, tk)
        p = p_ref[pl.ds(start, tk), :]          # slice resident P (no re-DMA)
    else:
        p = p_ref[...]                          # streamed per-k tile
    acc_ref[...] += jnp.dot(a_ref[...], p, preferred_element_type=jnp.float32)

    @pl.when(k == pl.num_programs(1) - 1)
    def _():
        agg = acc_ref[...]                      # [TM, 3Hp] f32
        z = jax.nn.sigmoid(agg[:, :hpad] + bz_ref[...])
        r = jax.nn.sigmoid(agg[:, hpad:2 * hpad] + br_ref[...])
        rh = (r * h_ref[...]).astype(whh_ref.dtype)
        q = jnp.dot(rh, whh_ref[...], preferred_element_type=jnp.float32)
        z_ref[...] = z
        u_ref[...] = agg[:, 2 * hpad:]          # A @ (X Wxh); bias added later
        q_ref[...] = q.astype(q_ref.dtype)      # bf16 -> MXU-ready for kernel 3


def _agg_gates_call(a, p, h, whh, bz, br, tm, tk, np_pad, hpad,
                    mm_dtype, resident_p, vmem_limit):
    kernel = functools.partial(agg_gates_kernel, hpad=hpad, tk=tk,
                               resident_p=resident_p)
    if resident_p:
        p_spec = pl.BlockSpec((np_pad, 3 * hpad), lambda i, k: (0, 0))
    else:
        p_spec = pl.BlockSpec((tk, 3 * hpad), lambda i, k: (k, 0))
    out_shape = (
        jax.ShapeDtypeStruct((np_pad, hpad), jnp.float32),   # z
        jax.ShapeDtypeStruct((np_pad, hpad), jnp.float32),   # u
        jax.ShapeDtypeStruct((np_pad, hpad), mm_dtype),      # q
    )
    return pl.pallas_call(
        kernel,
        out_shape=out_shape,
        grid=(np_pad // tm, np_pad // tk),
        in_specs=[
            pl.BlockSpec((tm, tk), lambda i, k: (i, k)),       # A tile
            p_spec,                                            # P (resident/stream)
            pl.BlockSpec((tm, hpad), lambda i, k: (i, 0)),     # h row tile
            pl.BlockSpec((hpad, hpad), lambda i, k: (0, 0)),   # Whh
            pl.BlockSpec((1, hpad), lambda i, k: (0, 0)),      # bz
            pl.BlockSpec((1, hpad), lambda i, k: (0, 0)),      # br
        ],
        out_specs=tuple(pl.BlockSpec((tm, hpad), lambda i, k: (i, 0))
                        for _ in range(3)),
        scratch_shapes=[pltpu.VMEM((tm, 3 * hpad), jnp.float32)],
        compiler_params=pltpu.CompilerParams(
            dimension_semantics=("parallel", "arbitrary"),
            vmem_limit_bytes=vmem_limit),
    )(a, p, h, whh, bz, br)


# -----------------------------------------------------------------------------
# Kernel 3: tiled A @ Q (k-reduction, Q resident) + GRU blend
# -----------------------------------------------------------------------------
def agg_out_kernel(a_ref, q_ref, z_ref, u_ref, h_ref, bh_ref,
                   hout_ref, acc_ref, *, tk, resident_q):
    k = pl.program_id(1)

    @pl.when(k == 0)
    def _():
        acc_ref[...] = jnp.zeros_like(acc_ref)

    if resident_q:
        start = pl.multiple_of(k * tk, tk)
        q = q_ref[pl.ds(start, tk), :]
    else:
        q = q_ref[...]
    acc_ref[...] += jnp.dot(a_ref[...], q, preferred_element_type=jnp.float32)

    @pl.when(k == pl.num_programs(1) - 1)
    def _():
        h_tilde = jnp.tanh(u_ref[...] + acc_ref[...] + bh_ref[...])
        z = z_ref[...]
        hout_ref[...] = z * h_ref[...] + (1.0 - z) * h_tilde


def _agg_out_call(a, q, z, u, h, bh, tm, tk, np_pad, hpad,
                  resident_q, vmem_limit):
    kernel = functools.partial(agg_out_kernel, tk=tk, resident_q=resident_q)
    if resident_q:
        q_spec = pl.BlockSpec((np_pad, hpad), lambda i, k: (0, 0))
    else:
        q_spec = pl.BlockSpec((tk, hpad), lambda i, k: (k, 0))
    return pl.pallas_call(
        kernel,
        out_shape=jax.ShapeDtypeStruct((np_pad, hpad), jnp.float32),
        grid=(np_pad // tm, np_pad // tk),
        in_specs=[
            pl.BlockSpec((tm, tk), lambda i, k: (i, k)),       # A tile
            q_spec,                                            # Q (resident/stream)
            pl.BlockSpec((tm, hpad), lambda i, k: (i, 0)),     # z
            pl.BlockSpec((tm, hpad), lambda i, k: (i, 0)),     # u
            pl.BlockSpec((tm, hpad), lambda i, k: (i, 0)),     # h
            pl.BlockSpec((1, hpad), lambda i, k: (0, 0)),      # bh
        ],
        out_specs=pl.BlockSpec((tm, hpad), lambda i, k: (i, 0)),
        scratch_shapes=[pltpu.VMEM((tm, hpad), jnp.float32)],
        compiler_params=pltpu.CompilerParams(
            dimension_semantics=("parallel", "arbitrary"),
            vmem_limit_bytes=vmem_limit),
    )(a, q, z, u, h, bh)


# -----------------------------------------------------------------------------
# Plain-JAX glue: dense normalized adjacency, built ONCE per graph directly at
# padded size (scatter-add in f32 for exact duplicate-edge accumulation, then a
# single cast). Matches the spec's MessagePassing: deg from edge_index[0]=row,
# message = norm * x[col], scatter-add at row  =>  out = A @ x.
# TODO(synk): edge-index scatter / degree normalization stays in plain JAX
# (sparse index glue, no clean dense-tile Pallas equivalent).
# -----------------------------------------------------------------------------
def build_norm_adj_padded(edge_index, num_nodes, np_pad, improved=True,
                          out_dtype=jnp.bfloat16):
    row, col = edge_index[0], edge_index[1]
    ew = jnp.ones((edge_index.shape[1],), dtype=jnp.float32)
    loop_idx = jnp.arange(num_nodes, dtype=edge_index.dtype)
    row = jnp.concatenate([row, loop_idx])
    col = jnp.concatenate([col, loop_idx])
    loop_w = jnp.full((num_nodes,), 2.0 if improved else 1.0, jnp.float32)
    ew = jnp.concatenate([ew, loop_w])

    deg = jnp.zeros((num_nodes,), jnp.float32).at[row].add(ew)
    deg_inv = jnp.power(deg, -0.5)
    deg_inv = jnp.where(jnp.isinf(deg_inv), 0.0, deg_inv)
    norm = deg_inv[row] * ew * deg_inv[col]

    a_pad = jnp.zeros((np_pad, np_pad), jnp.float32).at[row, col].add(norm)
    return a_pad.astype(out_dtype)


def build_norm_adj(edge_index, num_nodes, improved=True, dtype=jnp.float32):
    return build_norm_adj_padded(edge_index, num_nodes, num_nodes,
                                 improved=improved, out_dtype=dtype)


# -----------------------------------------------------------------------------
# Wrapper: pack / pad parameters.
#   w_cat = [[Wxz|Wxr|Wxh] ; [Whz|Whr|0]]  (mm_dtype)  — one fused projection.
#   Biases pre-summed pairwise (GCNConv adds bias AFTER aggregation).
# -----------------------------------------------------------------------------
def pack_params(raw_params, hidden_size, mm_dtype):
    hpad = _round_up(hidden_size, LANE)
    f_in_pad = _round_up(raw_params[0][0].shape[0], 8)

    def pad_b(b):
        return jnp.zeros((1, hpad), jnp.float32).at[:, :hidden_size].set(
            b.astype(jnp.float32))

    packed = []
    for li, p in enumerate(raw_params):
        wxz, whz, wxr, whr, wxh, whh, bxz, bhz, bxr, bhr, bxh, bhh = p
        in_dim = wxz.shape[0]
        in_rows = f_in_pad if li == 0 else hpad

        wx = jnp.zeros((in_rows, 3 * hpad), jnp.float32)
        wx = wx.at[:in_dim, 0:hidden_size].set(wxz.astype(jnp.float32))
        wx = wx.at[:in_dim, hpad:hpad + hidden_size].set(wxr.astype(jnp.float32))
        wx = wx.at[:in_dim, 2 * hpad:2 * hpad + hidden_size].set(
            wxh.astype(jnp.float32))

        wh = jnp.zeros((hpad, 3 * hpad), jnp.float32)
        wh = wh.at[:hidden_size, 0:hidden_size].set(whz.astype(jnp.float32))
        wh = wh.at[:hidden_size, hpad:hpad + hidden_size].set(
            whr.astype(jnp.float32))
        # third column-block stays 0: Whh acts on (r*h), handled in kernel 2.

        w_cat = jnp.concatenate([wx, wh], axis=0).astype(mm_dtype)
        whh_p = jnp.zeros((hpad, hpad), jnp.float32).at[
            :hidden_size, :hidden_size].set(whh.astype(jnp.float32)).astype(mm_dtype)

        bz = pad_b(bxz + bhz)
        br = pad_b(bxr + bhr)
        bh = pad_b(bxh + bhh)
        packed.append((w_cat, whh_p, bz, br, bh))
    return packed, hpad, f_in_pad


# -----------------------------------------------------------------------------
# Module forward: graph_gru_gcn
#   a_mm: optional precomputed padded adjacency (build_norm_adj_padded with the
#   same np_pad/mm_dtype) — hoist it out of recurrent loops; A is static per
#   graph and reused by all layers/timesteps.
# -----------------------------------------------------------------------------
def graph_gru_gcn_forward(raw_params, inp, edge_index, h,
                          use_bf16_matmul=True, a_mm=None):
    n_layer = len(raw_params)
    n_nodes, f_in = inp.shape
    hidden = h.shape[-1]
    mm_dtype = jnp.bfloat16 if use_bf16_matmul else jnp.float32
    mm_bytes = jnp.dtype(mm_dtype).itemsize

    packed, hpad, f_in_pad = pack_params(raw_params, hidden, mm_dtype)
    tm, tk, np_pad = _choose_tiles(n_nodes)
    vmem_limit = _vmem_limit_bytes()
    # Resident P/Q only if the kernel-2 footprint leaves headroom (v7x-safe).
    resident = (_agg_vmem_estimate(tm, tk, np_pad, hpad, mm_bytes, True)
                <= int(0.6 * vmem_limit))

    if a_mm is None:
        a_mm = build_norm_adj_padded(edge_index, n_nodes, np_pad,
                                     improved=True, out_dtype=mm_dtype)

    x = jnp.zeros((np_pad, f_in_pad), jnp.float32).at[:n_nodes, :f_in].set(
        inp.astype(jnp.float32))
    h_pad = jnp.zeros((n_layer, np_pad, hpad), jnp.float32).at[
        :, :n_nodes, :hidden].set(h.astype(jnp.float32))

    # NOTE: padded ROWS of h_out can be nonzero when biases are nonzero
    # (h_out = (1-z)*tanh(bh)); this is neutralized because A's padded columns
    # are zero and the final slice drops padded rows. Keep A padding zeroed.
    outs = []
    for li in range(n_layer):
        w_cat, whh, bz, br, bh = packed[li]
        h_i = h_pad[li]
        xh = jnp.concatenate([x, h_i], axis=-1).astype(mm_dtype)
        p = _proj_call(xh, w_cat, tm, np_pad, hpad, mm_dtype, vmem_limit)
        z, u, q = _agg_gates_call(a_mm, p, h_i, whh, bz, br, tm, tk, np_pad,
                                  hpad, mm_dtype, resident, vmem_limit)
        h_out = _agg_out_call(a_mm, q, z, u, h_i, bh, tm, tk, np_pad, hpad,
                              resident, vmem_limit)
        outs.append(h_out)
        x = h_out                            # padded [Np, Hp]

    h_out_all = jnp.stack(outs, axis=0)[:, :n_nodes, :hidden]
    return h_out_all, h_out_all              # (out, h_out) identical, as in spec


# -----------------------------------------------------------------------------
# Deterministic parameter init (glorot-uniform weights, zero biases)
# -----------------------------------------------------------------------------
def glorot_uniform(key, in_dim, out_dim):
    stdv = math.sqrt(6.0 / (in_dim + out_dim))
    return jax.random.uniform(key, (in_dim, out_dim), jnp.float32, -stdv, stdv)


def init_params(key, input_size, hidden_size, n_layer):
    params = []
    for i in range(n_layer):
        in_dim = input_size if i == 0 else hidden_size
        key, *ks = jax.random.split(key, 7)
        wxz = glorot_uniform(ks[0], in_dim, hidden_size)
        whz = glorot_uniform(ks[1], hidden_size, hidden_size)
        wxr = glorot_uniform(ks[2], in_dim, hidden_size)
        whr = glorot_uniform(ks[3], hidden_size, hidden_size)
        wxh = glorot_uniform(ks[4], in_dim, hidden_size)
        whh = glorot_uniform(ks[5], hidden_size, hidden_size)
        zb = jnp.zeros((1, hidden_size), jnp.float32)  # bias=True, zeros init
        params.append((wxz, whz, wxr, whr, wxh, whh, zb, zb, zb, zb, zb, zb))
    return params


# -----------------------------------------------------------------------------
# Pure-JAX reference (correctness check)
# -----------------------------------------------------------------------------
def reference_forward(params, inp, edge_index, h):
    a = build_norm_adj(edge_index, inp.shape[0], improved=True,
                       dtype=jnp.float32)

    def gcn(x, w, b):
        return a @ (x @ w) + b

    x = inp
    outs = []
    for p in params:
        wxz, whz, wxr, whr, wxh, whh, bxz, bhz, bxr, bhr, bxh, bhh = p
        hi = h[len(outs)]
        z = jax.nn.sigmoid(gcn(x, wxz, bxz) + gcn(hi, whz, bhz))
        r = jax.nn.sigmoid(gcn(x, wxr, bxr) + gcn(hi, whr, bhr))
        ht = jnp.tanh(gcn(x, wxh, bxh) + gcn(r * hi, whh, bhh))
        x = z * hi + (1.0 - z) * ht
        outs.append(x)
    return jnp.stack(outs, axis=0)


if __name__ == "__main__":
    # Small shapes consistent with the module's forward.
    n_nodes = 16
    input_size = 8
    hidden_size = 32
    n_layer = 2
    n_edges = 40

    key = jax.random.PRNGKey(0)
    k_x, k_h, k_src, k_dst, k_p = jax.random.split(key, 5)

    inp = jax.random.normal(k_x, (n_nodes, input_size), jnp.float32)
    h0 = jax.random.normal(k_h, (n_layer, n_nodes, hidden_size), jnp.float32)
    edge_index = jnp.stack([
        jax.random.randint(k_src, (n_edges,), 0, n_nodes, dtype=jnp.int32),
        jax.random.randint(k_dst, (n_edges,), 0, n_nodes, dtype=jnp.int32),
    ], axis=0)

    params = init_params(k_p, input_size, hidden_size, n_layer)
    ref = jax.block_until_ready(reference_forward(params, inp, edge_index, h0))

    _, _, np_pad = _choose_tiles(n_nodes)

    # bf16-A fast path (adjacency hoisted / precomputed once per graph).
    a_bf16 = build_norm_adj_padded(edge_index, n_nodes, np_pad,
                                   improved=True, out_dtype=jnp.bfloat16)
    out, h_out = graph_gru_gcn_forward(params, inp, edge_index, h0,
                                       use_bf16_matmul=True, a_mm=a_bf16)
    out = jax.block_until_ready(out)
    h_out = jax.block_until_ready(h_out)
    assert out.shape == (n_layer, n_nodes, hidden_size)
    assert jnp.allclose(out, ref, atol=3e-2, rtol=3e-2)
    assert jnp.allclose(h_out, ref, atol=3e-2, rtol=3e-2)

    # f32-A fallback path (accuracy-sensitive use).
    a_f32 = build_norm_adj_padded(edge_index, n_nodes, np_pad,
                                  improved=True, out_dtype=jnp.float32)
    out32, _ = graph_gru_gcn_forward(params, inp, edge_index, h0,
                                     use_bf16_matmul=False, a_mm=a_f32)
    out32 = jax.block_until_ready(out32)
    assert jnp.allclose(out32, ref, atol=1e-4, rtol=1e-4)

    print("KERNEL_OK")
</pallas_src>

<mosaic_0001>
module attributes {stable_mosaic.version = 11 : i64} {
  func.func @proj_kernel(%arg0: i32, %arg1: memref<16x136xbf16, #tpu.memory_space<vmem>>, %arg2: memref<136x384xbf16, #tpu.memory_space<vmem>>, %arg3: memref<16x384xbf16, #tpu.memory_space<vmem>>) attributes {dimension_semantics = [#tpu.dimension_semantics<parallel>], iteration_bounds = array<i64: 1>, scalar_prefetch = 0 : i64, scratch_operands = 0 : i64, tpu.core_type = #tpu.core_type<tc>, window_params = [{transform_indices = @transform_0, window_bounds = array<i64: 16, 136>}, {pipeline_mode = #tpu.pipeline_mode<synchronous>, transform_indices = @transform_1, window_bounds = array<i64: 136, 384>}, {transform_indices = @transform_2, window_bounds = array<i64: 16, 384>}]} {
    %c0 = arith.constant 0 : index
    %c0_0 = arith.constant 0 : index
    %0 = vector.load %arg1[%c0, %c0_0] : memref<16x136xbf16, #tpu.memory_space<vmem>>, vector<16x136xbf16>
    %c0_1 = arith.constant 0 : index
    %c0_2 = arith.constant 0 : index
    %1 = vector.load %arg2[%c0_1, %c0_2] : memref<136x384xbf16, #tpu.memory_space<vmem>>, vector<136x384xbf16>
    %cst = arith.constant dense<0.000000e+00> : vector<16x384xf32>
    %2 = tpu.matmul %0, %1, %cst {dimension_numbers = #tpu.dot_dimension_numbers<[1], [0], [0], [1], [0, 0, 1, 1], [], []>} : vector<16x136xbf16>, vector<136x384xbf16>, vector<16x384xf32> -> vector<16x384xf32>
    %3 = arith.truncf %2 : vector<16x384xf32> to vector<16x384xbf16>
    %c0_3 = arith.constant 0 : index
    %c0_4 = arith.constant 0 : index
    %4 = vector.load %arg3[%c0_3, %c0_4] : memref<16x384xbf16, #tpu.memory_space<vmem>>, vector<16x384xbf16>
    tpu.vector_store %arg3[%c0_3, %c0_4], %3 {strides = array<i32>} : memref<16x384xbf16, #tpu.memory_space<vmem>>, vector<16x384xbf16>,
    return
  }
  func.func @transform_0(%arg0: i32) -> (i32, i32) {
    %c0_i32 = arith.constant 0 : i32
    %c0_i32_0 = arith.constant 0 : i32
    return %arg0, %c0_i32 : i32, i32
  }
  func.func @transform_1(%arg0: i32) -> (i32, i32) {
    %c0_i32 = arith.constant 0 : i32
    %c0_i32_0 = arith.constant 0 : i32
    %c0_i32_1 = arith.constant 0 : i32
    return %c0_i32, %c0_i32_0 : i32, i32
  }
  func.func @transform_2(%arg0: i32) -> (i32, i32) {
    %c0_i32 = arith.constant 0 : i32
    %c0_i32_0 = arith.constant 0 : i32
    return %arg0, %c0_i32 : i32, i32
  }
}

</mosaic_0001>

<llo_original>
// kernel: tpu_custom_call.1
$region0: #{tpu_custom_call.1}
  #allocation0 [shape = 'u32[]', space=smem, size = 0x4, offset = 0x4, fixed_abs, tag = 'smem constant byte address 0x4 - core index']
  #allocation1 [shape = 'u32[144,128]{1,0:T(1,128)}', space=vmem, size = 0x12000, scoped, tag = 'internal scratch']
  %s0 = inlined_call_operand.hbm [shape: bf16[16,136], index: 0, kind: input, shape index: {}]
  %s1 = inlined_call_operand.hbm [shape: bf16[136,384], index: 1, kind: input, shape index: {}]
  %s2 = inlined_call_operand.hbm [shape: bf16[16,384], index: 2, kind: output, shape index: {}]
  %s3 = sld [smem:[#allocation0]]
  $region26: #{tpu_custom_call.1} parent=0
    _
  %s5 = ssub.s32 1, %s3
  %s6 = scalar_select 0, %s5, %s3
  $region1: #{tpu_custom_call.1} parent=0
    #allocation2 [shape = 'u8[8192]{0}', space=vmem, size = 0x2000, scoped, tag = 'input window, operand 0, single buffered']
    #allocation3 [shape = 's32[1]{0}', space=sflag, size = 0x4, scoped, tag = 'scoped memory for tpu_custom_call.1']
    #allocation4 [shape = 's32[1]{0}', space=sflag, size = 0x4, scoped, tag = 'scoped memory for tpu_custom_call.1']
    #allocation5 [shape = 'u8[104448]{0}', space=vmem, size = 0x19800, scoped, tag = 'input window, operand 1, single buffered']
    #allocation6 [shape = 's32[1]{0}', space=sflag, size = 0x4, scoped, tag = 'scoped memory for tpu_custom_call.1']
    #allocation7 [shape = 'u8[12288]{0}', space=vmem, size = 0x3000, scoped, tag = 'output window, operand 0, single buffered']
    %7 = vsyncpa [#allocation3], 0
    %8 = vsyncpa [#allocation6], 0
    %9 = vsyncpa [#allocation4], 0
    // Predicated region
    $region2: #{tpu_custom_call.1} parent=1 // pred_check
      _
    $region3: #{tpu_custom_call.1} parent=1 // pred_check_branch
      %11 = sbr.rel (0) target = $region5
    $region4: #{tpu_custom_call.1} parent=1 // pred_region
      %s13 = ssub.s32 256, 256
      %14 = vsyncadd [#allocation3], %s13
      %s15 = sshll.u32 [#allocation2], 4
      %s16 = int_to_ptr.vmem [resolvable:$true] %s15
      %21 = dma.hbm_to_vmem [thread:$0]  %s0, 256, %s16, [#allocation3], 128, 128, 8
    $region5: #{tpu_custom_call.1} parent=1 // pred_fallthru
      _
    // Predicated region
    $region6: #{tpu_custom_call.1} parent=1 // pred_check
      _
    $region7: #{tpu_custom_call.1} parent=1 // pred_check_branch
      %23 = sbr.rel (0) target = $region9
    $region8: #{tpu_custom_call.1} parent=1 // pred_region
      %s25 = ssub.s32 3264, 3264
      %26 = vsyncadd [#allocation6], %s25
      %s27 = sshll.u32 [#allocation5], 4
      %s28 = int_to_ptr.vmem [resolvable:$true] %s27
      %33 = dma.hbm_to_vmem [thread:$0]  %s1, 3264, %s28, [#allocation6], 192, 192, 12
    $region9: #{tpu_custom_call.1} parent=1 // pred_fallthru
      _
    // Predicated region
    $region10: #{tpu_custom_call.1} parent=1 // pred_check
      _
    $region11: #{tpu_custom_call.1} parent=1 // pred_check_branch
      %35 = sbr.rel (0) target = $region13
    $region12: #{tpu_custom_call.1} parent=1 // pred_region
      %36 = dma.done [#allocation3], 256
    $region13: #{tpu_custom_call.1} parent=1 // pred_fallthru
      _
    // Predicated region
    $region14: #{tpu_custom_call.1} parent=1 // pred_check
      _
    $region15: #{tpu_custom_call.1} parent=1 // pred_check_branch
      %38 = sbr.rel (0) target = $region17
    $region16: #{tpu_custom_call.1} parent=1 // pred_region
      %39 = dma.done [#allocation6], 3264
    $region17: #{tpu_custom_call.1} parent=1 // pred_fallthru
      _
    %v41 = vld [vmem:[#allocation2] sm:$0xff]
    %v42 = vld [vmem:[#allocation2 + $0x8] sm:$0xff]
    %v43 = vld [vmem:[#allocation5] sm:$0xff]
    %v44 = vld [vmem:[#allocation5 + $0x8] sm:$0xf]
    %v45 = vld [vmem:[#allocation5 + $0xc] sm:$0xff]
    %v46 = vld [vmem:[#allocation5 + $0x14] sm:$0xf]
    %v47 = vld [vmem:[#allocation5 + $0x18] sm:$0xff]
    %v48 = vld [vmem:[#allocation5 + $0x20] sm:$0xf]
    %v49 = vld [vmem:[#allocation5 + $0x24] sm:$0xff]
    %v50 = vld [vmem:[#allocation5 + $0x2c] sm:$0xf]
    %v51 = vld [vmem:[#allocation5 + $0x30] sm:$0xff]
    %v52 = vld [vmem:[#allocation5 + $0x38] sm:$0xf]
    %v53 = vld [vmem:[#allocation5 + $0x3c] sm:$0xff]
    %v54 = vld [vmem:[#allocation5 + $0x44] sm:$0xf]
    %v55 = vld [vmem:[#allocation5 + $0x48] sm:$0xff]
    %v56 = vld [vmem:[#allocation5 + $0x50] sm:$0xf]
    %v57 = vld [vmem:[#allocation5 + $0x54] sm:$0xff]
    %v58 = vld [vmem:[#allocation5 + $0x5c] sm:$0xf]
    %v59 = vld [vmem:[#allocation5 + $0x60] sm:$0xff]
    %v60 = vld [vmem:[#allocation5 + $0x68] sm:$0xf]
    %v61 = vld [vmem:[#allocation5 + $0x6c] sm:$0xff]
    %v62 = vld [vmem:[#allocation5 + $0x74] sm:$0xf]
    %v63 = vld [vmem:[#allocation5 + $0x78] sm:$0xff]
    %v64 = vld [vmem:[#allocation5 + $0x80] sm:$0xf]
    %v65 = vld [vmem:[#allocation5 + $0x84] sm:$0xff]
    %v66 = vld [vmem:[#allocation5 + $0x8c] sm:$0xf]
    %v67 = vld [vmem:[#allocation5 + $0x90] sm:$0xff]
    %v68 = vld [vmem:[#allocation5 + $0x98] sm:$0xf]
    %v69 = vld [vmem:[#allocation5 + $0x9c] sm:$0xff]
    %v70 = vld [vmem:[#allocation5 + $0xa4] sm:$0xf]
    %v71 = vld [vmem:[#allocation5 + $0xa8] sm:$0xff]
    %v72 = vld [vmem:[#allocation5 + $0xb0] sm:$0xf]
    %v73 = vld [vmem:[#allocation5 + $0xb4] sm:$0xff]
    %v74 = vld [vmem:[#allocation5 + $0xbc] sm:$0xf]
    %v75 = vld [vmem:[#allocation5 + $0xc0] sm:$0xff]
    %v76 = vld [vmem:[#allocation5 + $0xc8] sm:$0xf]
    %v79 = vunpack.c.l.b16 %v41
    %v80 = vunpack.c.h.b16 %v41
    %v81 = vunpack.c.l.b16 %v42
    %v82 = vunpack.c.h.b16 %v42
    %v83 = vpack.c.b16 %v81, %v79
    %v84 = vpack.c.b16 %v82, %v80
    %v120 = vunpack.c.l.b16 %v43
    %v121 = vunpack.c.h.b16 %v43
    %v122 = vunpack.c.l.b16 %v44
    %v123 = vunpack.c.l.b16 %v45
    %v124 = vunpack.c.h.b16 %v45
    %v125 = vunpack.c.l.b16 %v46
    %v126 = vunpack.c.l.b16 %v47
    %v127 = vunpack.c.h.b16 %v47
    %v128 = vunpack.c.l.b16 %v48
    %v129 = vunpack.c.l.b16 %v49
    %v130 = vunpack.c.h.b16 %v49
    %v131 = vunpack.c.l.b16 %v50
    %v132 = vunpack.c.l.b16 %v51
    %v133 = vunpack.c.h.b16 %v51
    %v134 = vunpack.c.l.b16 %v52
    %v135 = vunpack.c.l.b16 %v53
    %v136 = vunpack.c.h.b16 %v53
    %v137 = vunpack.c.l.b16 %v54
    %v138 = vunpack.c.l.b16 %v55
    %v139 = vunpack.c.h.b16 %v55
    %v140 = vunpack.c.l.b16 %v56
    %v141 = vunpack.c.l.b16 %v57
    %v142 = vunpack.c.h.b16 %v57
    %v143 = vunpack.c.l.b16 %v58
    %v144 = vunpack.c.l.b16 %v59
    %v145 = vunpack.c.h.b16 %v59
    %v146 = vunpack.c.l.b16 %v60
    %v147 = vunpack.c.l.b16 %v61
    %v148 = vunpack.c.h.b16 %v61
    %v149 = vunpack.c.l.b16 %v62
    %v150 = vunpack.c.l.b16 %v63
    %v151 = vunpack.c.h.b16 %v63
    %v152 = vunpack.c.l.b16 %v64
    %v153 = vunpack.c.l.b16 %v65
    %v154 = vunpack.c.h.b16 %v65
    %v155 = vunpack.c.l.b16 %v66
    %v156 = vunpack.c.l.b16 %v67
    %v157 = vunpack.c.h.b16 %v67
    %v158 = vunpack.c.l.b16 %v68
    %v159 = vunpack.c.l.b16 %v69
    %v160 = vunpack.c.h.b16 %v69
    %v161 = vunpack.c.l.b16 %v70
    %v162 = vunpack.c.l.b16 %v71
    %v163 = vunpack.c.h.b16 %v71
    %v164 = vunpack.c.l.b16 %v72
    %v165 = vunpack.c.l.b16 %v73
    %v166 = vunpack.c.h.b16 %v73
    %v167 = vunpack.c.l.b16 %v74
    %v168 = vunpack.c.l.b16 %v75
    %v169 = vunpack.c.h.b16 %v75
    %v170 = vunpack.c.l.b16 %v76
    %v171 = vpack.c.b16 %v123, %v120
    %v172 = vpack.c.b16 %v124, %v121
    %v173 = vpack.c.b16 %v125, %v122
    %v174 = vpack.c.b16 %v129, %v126
    %v175 = vpack.c.b16 %v130, %v127
    %v176 = vpack.c.b16 %v131, %v128
    %v177 = vpack.c.b16 %v135, %v132
    %v178 = vpack.c.b16 %v136, %v133
    %v179 = vpack.c.b16 %v137, %v134
    %v180 = vpack.c.b16 %v141, %v138
    %v181 = vpack.c.b16 %v142, %v139
    %v182 = vpack.c.b16 %v143, %v140
    %v183 = vpack.c.b16 %v147, %v144
    %v184 = vpack.c.b16 %v148, %v145
    %v185 = vpack.c.b16 %v149, %v146
    %v186 = vpack.c.b16 %v153, %v150
    %v187 = vpack.c.b16 %v154, %v151
    %v188 = vpack.c.b16 %v155, %v152
    %v189 = vpack.c.b16 %v159, %v156
    %v190 = vpack.c.b16 %v160, %v157
    %v191 = vpack.c.b16 %v161, %v158
    %v192 = vpack.c.b16 %v165, %v162
    %v193 = vpack.c.b16 %v166, %v163
    %v194 = vpack.c.b16 %v167, %v164
    %v195 = vpack.c.b16 %v168, %v168
    %v196 = vpack.c.b16 %v169, %v169
    %v197 = vpack.c.b16 %v170, %v170
    %vm222 = vcmask 64512
    %v224 = vsel %vm222, %v84, 0
    %vm226 = vcmask 1043456
    %v228 = vsel %vm226, %v195, 0
    %v231 = vsel %vm226, %v196, 0
    %v234 = vsel %vm226, %v197, 0
    %236 = vmatprep.subr.bf16.mxu0 %v193
    %237 = vmatpush1.bf16.msra.mxu0 %v192
    %238 = vmatprep.subr.bf16.mxu0 %v190
    %239 = vmatpush1.bf16.msra.mxu0 %v189
    %240 = vmatprep.subr.bf16.mxu0 %v187
    %241 = vmatpush1.bf16.msra.mxu0 %v186
    %242 = vmatprep.subr.bf16.mxu0 %v184
    %243 = vmatpush1.bf16.msra.mxu0 %v183
    %244 = vmatprep.subr.bf16.mxu0 %v181
    %245 = vmatpush1.bf16.msra.mxu0 %v180
    %246 = vmatprep.subr.bf16.mxu0 %v178
    %247 = vmatpush1.bf16.msra.mxu0 %v177
    %248 = vmatprep.subr.bf16.mxu0 %v175
    %249 = vmatpush1.bf16.msra.mxu0 %v174
    %250 = vmatprep.subr.bf16.mxu0 %v172
    %251 = vmatpush1.bf16.msra.mxu0 %v171
    %252 = vmatprep.subr.bf16.mxu0 0
    %253 = vmatpush2.bf16.msra.mxu0 0
    %254 = vmatprep.subr.bf16.mxu0 0
    %255 = vmatpush2.bf16.msra.mxu0 0
    %256 = vmatprep.subr.bf16.mxu0 0
    %257 = vmatpush2.bf16.msra.mxu0 0
    %258 = vmatprep.subr.bf16.mxu0 0
    %259 = vmatpush2.bf16.msra.mxu0 0
    %260 = vmatprep.subr.bf16.mxu0 0
    %261 = vmatpush2.bf16.msra.mxu0 0
    %262 = vmatprep.subr.bf16.mxu0 0
    %263 = vmatpush2.bf16.msra.mxu0 0
    %264 = vmatprep.subr.bf16.mxu0 0
    %265 = vmatpush2.bf16.msra.mxu0 0
    %266 = vmatprep.subr.bf16.mxu0 %v231
    %267 = vmatpush2.bf16.msra.mxu0 %v228
    %268 = vmatprep.mubr.bf16.mxu0 %v224
    %269 = vmatmul.mubr.bf16.gmra.mxu0 %v83
    %v270 = vpop.f32.mrf.mxu0
    %v271 = vadd.f32 0.0, %v270
    %v272 = vpop.f32.mrf.mxu0
    %v273 = vadd.f32 0.0, %v272
    %v274 = vpop.f32.mrf.mxu0
    %v275 = vadd.f32 0.0, %v274
    %v276 = vpop.f32.mrf.mxu0
    %v277 = vadd.f32 0.0, %v276
    %278 = vdwg.mxu0
    %279 = vmatprep.subr.bf16.mxu0 0
    %280 = vmatpush1.bf16.msra.mxu0 %v194
    %281 = vmatprep.subr.bf16.mxu0 0
    %282 = vmatpush1.bf16.msra.mxu0 %v191
    %283 = vmatprep.subr.bf16.mxu0 0
    %284 = vmatpush1.bf16.msra.mxu0 %v188
    %285 = vmatprep.subr.bf16.mxu0 0
    %286 = vmatpush1.bf16.msra.mxu0 %v185
    %287 = vmatprep.subr.bf16.mxu0 0
    %288 = vmatpush1.bf16.msra.mxu0 %v182
    %289 = vmatprep.subr.bf16.mxu0 0
    %290 = vmatpush1.bf16.msra.mxu0 %v179
    %291 = vmatprep.subr.bf16.mxu0 0
    %292 = vmatpush1.bf16.msra.mxu0 %v176
    %293 = vmatprep.subr.bf16.mxu0 0
    %294 = vmatpush1.bf16.msra.mxu0 %v173
    %295 = vmatprep.subr.bf16.mxu0 0
    %296 = vmatpush2.bf16.msra.mxu0 0
    %297 = vmatprep.subr.bf16.mxu0 0
    %298 = vmatpush2.bf16.msra.mxu0 0
    %299 = vmatprep.subr.bf16.mxu0 0
    %300 = vmatpush2.bf16.msra.mxu0 0
    %301 = vmatprep.subr.bf16.mxu0 0
    %302 = vmatpush2.bf16.msra.mxu0 0
    %303 = vmatprep.subr.bf16.mxu0 0
    %304 = vmatpush2.bf16.msra.mxu0 0
    %305 = vmatprep.subr.bf16.mxu0 0
    %306 = vmatpush2.bf16.msra.mxu0 0
    %307 = vmatprep.subr.bf16.mxu0 0
    %308 = vmatpush2.bf16.msra.mxu0 0
    %309 = vmatprep.subr.bf16.mxu0 0
    %310 = vmatpush2.bf16.msra.mxu0 %v234
    %311 = vmatprep.mubr.bf16.mxu0 %v224
    %312 = vmatmul.mubr.bf16.gmra.mxu0 %v83
    %v313 = vpop.f32.mrf.mxu0
    %v314 = vadd.f32 0.0, %v313
    %v315 = vpop.f32.mrf.mxu0
    %v316 = vpop.f32.mrf.mxu0
    %v317 = vadd.f32 0.0, %v316
    %v318 = vpop.f32.mrf.mxu0
    %319 = vdwg.mxu0
    %v320 = vpack.c.bf16 %v275, %v271
    %v321 = vpack.c.bf16 %v277, %v273
    %v322 = vpack.c.bf16 %v317, %v314
    %v326 = vunpack.c.l.b16 %v320
    %v327 = vunpack.c.l.b16 %v321
    %v328 = vunpack.c.l.b16 %v322
    %v329 = vunpack.c.h.b16 %v320
    %v330 = vunpack.c.h.b16 %v321
    %v331 = vunpack.c.h.b16 %v322
    %v332 = vpack.c.b16 %v327, %v326
    %v333 = vpack.c.b16 %v328, %v328
    %v334 = vpack.c.b16 %v330, %v329
    %v335 = vpack.c.b16 %v331, %v331
    %340 = vst [vmem:[#allocation7] sm:$0xff] %v332
    %341 = vst [vmem:[#allocation7 + $0x8] sm:$0xf] %v333
    %342 = vst [vmem:[#allocation7 + $0xc] sm:$0xff] %v334
    %343 = vst [vmem:[#allocation7 + $0x14] sm:$0xf] %v335
    // Predicated region
    $region18: #{tpu_custom_call.1} parent=1 // pred_check
      _
    $region19: #{tpu_custom_call.1} parent=1 // pred_check_branch
      %345 = sbr.rel (0) target = $region21
    $region20: #{tpu_custom_call.1} parent=1 // pred_region
      %s347 = ssub.s32 384, 384
      %348 = vsyncadd [#allocation4], %s347
      %s349 = sshll.u32 [#allocation7], 4
      %s350 = int_to_ptr.vmem [resolvable:$true] %s349
      %355 = dma.vmem_to_hbm [thread:$0]  %s350, 384, %s2, [#allocation4], 192, 192, 12
    $region21: #{tpu_custom_call.1} parent=1 // pred_fallthru
      _
    // Predicated region
    $region22: #{tpu_custom_call.1} parent=1 // pred_check
      _
    $region23: #{tpu_custom_call.1} parent=1 // pred_check_branch
      %357 = sbr.rel (0) target = $region25
    $region24: #{tpu_custom_call.1} parent=1 // pred_region
      %358 = dma.done [#allocation4], 384
    $region25: #{tpu_custom_call.1} parent=1 // pred_fallthru
      _
    %359 = vsyncpa [#allocation3], 1
    %360 = vsyncpa [#allocation6], 1
    %361 = vsyncpa [#allocation4], 1

</llo_original>
